<compile_context>
chip_gen: v5e
topology: v5e:2x2
jax: 0.10.0
libtpu: 0.0.40
codegen_flags: <defaults>
</compile_context>

<pallas_src>
import jax
import jax.numpy as jnp
from jax.experimental import pallas as pl
from jax.experimental.pallas import tpu as pltpu


def policy_mlp_kernel(x_ref, w1_ref, b1_ref, w2_ref, b2_ref, w3_ref, b3_ref, o_ref):
    # One batch tile per grid step.  Weights/biases have constant index_maps so
    # Pallas keeps them VMEM-resident across grid steps; only state/output stream.
    x = x_ref[...].astype(jnp.float32)  # allows bf16 state streaming; f32 math throughout

    a2 = jnp.dot(x, w1_ref[...], preferred_element_type=jnp.float32) + b1_ref[...]
    a2 = jnp.maximum(a2, 0.0)

    a3 = jnp.dot(a2, w2_ref[...], preferred_element_type=jnp.float32) + b2_ref[...]
    a3 = jnp.maximum(a3, 0.0)

    a4 = jnp.dot(a3, w3_ref[...], preferred_element_type=jnp.float32) + b3_ref[...]
    o_ref[...] = a4.astype(o_ref.dtype)  # (tile_b, n_actions) store; no padding


def init_params(key, state_shape, n_actions):
    """Deterministic init matching the nn.Linear shapes of Policy.__init__ (torch layout)."""
    ks = jax.random.split(key, 6)

    def lin(kw, kb, fan_in, fan_out):
        bound = 1.0 / jnp.sqrt(fan_in)
        w = jax.random.uniform(kw, (fan_out, fan_in), jnp.float32, -bound, bound)
        b = jax.random.uniform(kb, (fan_out,), jnp.float32, -bound, bound)
        return w, b

    w1, b1 = lin(ks[0], ks[1], state_shape, 24)
    w2, b2 = lin(ks[2], ks[3], 24, 24)
    w3, b3 = lin(ks[4], ks[5], 24, n_actions)
    return {"w1": w1, "b1": b1, "w2": w2, "b2": b2, "w3": w3, "b3": b3}


def prepare_params(torch_params):
    """ONE-TIME conversion from torch layout (out,in)/(out,) to kernel layout
    (in,out)/(1,out).  No padding of the final layer (output is emitted
    lane-exact as (B, n_actions))."""
    return {
        "w1t": torch_params["w1"].T,              # (state_shape, 24)
        "b1": torch_params["b1"].reshape(1, -1),  # (1, 24)
        "w2t": torch_params["w2"].T,              # (24, 24)
        "b2": torch_params["b2"].reshape(1, -1),  # (1, 24)
        "w3t": torch_params["w3"].T,              # (24, n_actions)
        "b3": torch_params["b3"].reshape(1, -1),  # (1, n_actions)
    }


def _pick_batch_tile(b, dtype):
    """Largest batch tile that (a) keeps >= 2 grid steps when possible so v7x's
    two TensorCores both get work, (b) respects sublane packing for the state
    dtype, (c) is capped at 4096 rows (per-step VMEM stays < ~1 MiB)."""
    itemsize = jnp.dtype(dtype).itemsize
    sub = 8 * max(1, 4 // itemsize)  # 8 rows for f32, 16 for bf16
    if b <= 2 * sub:
        return b  # single full-array block (exempt from the (8,128) rule)
    half = (b + 1) // 2
    tile = min(4096, (half // sub) * sub)
    return max(tile, sub)


@jax.jit
def policy_forward(state, prepared):
    """state: (B, state_shape); prepared: output of prepare_params (call once)."""
    w1t, b1 = prepared["w1t"], prepared["b1"]
    w2t, b2 = prepared["w2t"], prepared["b2"]
    w3t, b3 = prepared["w3t"], prepared["b3"]

    b, sdim = state.shape
    h1 = w1t.shape[1]
    h2 = w2t.shape[1]
    n_actions = w3t.shape[1]

    tile_b = _pick_batch_tile(b, state.dtype)
    n_tiles = pl.cdiv(b, tile_b)  # partial last tile is masked by Pallas

    const = lambda arr: pl.BlockSpec(arr.shape, lambda i: (0, 0))  # VMEM-resident

    flops = 2 * b * (sdim * h1 + h1 * h2 + h2 * n_actions)
    bytes_accessed = (
        b * sdim * jnp.dtype(state.dtype).itemsize
        + b * n_actions * 4
        + sum(a.size * jnp.dtype(a.dtype).itemsize for a in (w1t, b1, w2t, b2, w3t, b3))
    )

    return pl.pallas_call(
        policy_mlp_kernel,
        out_shape=jax.ShapeDtypeStruct((b, n_actions), jnp.float32),
        grid=(n_tiles,),
        in_specs=[
            pl.BlockSpec((tile_b, sdim), lambda i: (i, 0)),  # state tiles stream
            const(w1t), const(b1),
            const(w2t), const(b2),
            const(w3t), const(b3),
        ],
        out_specs=pl.BlockSpec((tile_b, n_actions), lambda i: (i, 0)),
        compiler_params=pltpu.CompilerParams(
            dimension_semantics=("parallel",)),  # >=2 tiles -> both v7x TCs busy
        cost_estimate=pl.CostEstimate(
            flops=flops, transcendentals=0, bytes_accessed=bytes_accessed),
    )(state, w1t, b1, w2t, b2, w3t, b3)


def reference_forward(state, p):
    a2 = jnp.maximum(state @ p["w1"].T + p["b1"], 0.0)
    a3 = jnp.maximum(a2 @ p["w2"].T + p["b2"], 0.0)
    return a3 @ p["w3"].T + p["b3"]


if __name__ == "__main__":
    key = jax.random.PRNGKey(0)
    state_shape, n_actions, batch = 4, 2, 128  # CartPole-like dims, batched rollout states

    pkey, xkey = jax.random.split(key)
    torch_params = init_params(pkey, state_shape, n_actions)
    prepared = prepare_params(torch_params)  # one-time layout conversion (hoisted)
    state = jax.random.normal(xkey, (batch, state_shape), jnp.float32)

    out = policy_forward(state, prepared)
    jax.block_until_ready(out)

    ref = reference_forward(state, torch_params)
    assert out.shape == (batch, n_actions), out.shape
    assert jnp.allclose(out, ref, atol=1e-5, rtol=1e-5), "mismatch vs reference"

    print("KERNEL_OK")
</pallas_src>

<mosaic_0001>
module attributes {stable_mosaic.version = 11 : i64} {
  func.func @policy_mlp_kernel(%arg0: i32, %arg1: memref<64x4xf32, #tpu.memory_space<vmem>>, %arg2: memref<4x24xf32, #tpu.memory_space<vmem>>, %arg3: memref<1x24xf32, #tpu.memory_space<vmem>>, %arg4: memref<24x24xf32, #tpu.memory_space<vmem>>, %arg5: memref<1x24xf32, #tpu.memory_space<vmem>>, %arg6: memref<24x2xf32, #tpu.memory_space<vmem>>, %arg7: memref<1x2xf32, #tpu.memory_space<vmem>>, %arg8: memref<64x2xf32, #tpu.memory_space<vmem>>) attributes {dimension_semantics = [#tpu.dimension_semantics<parallel>], iteration_bounds = array<i64: 2>, scalar_prefetch = 0 : i64, scratch_operands = 0 : i64, tpu.core_type = #tpu.core_type<tc>, window_params = [{transform_indices = @transform_0, window_bounds = array<i64: 64, 4>}, {pipeline_mode = #tpu.pipeline_mode<synchronous>, transform_indices = @transform_1, window_bounds = array<i64: 4, 24>}, {pipeline_mode = #tpu.pipeline_mode<synchronous>, transform_indices = @transform_2, window_bounds = array<i64: 1, 24>}, {pipeline_mode = #tpu.pipeline_mode<synchronous>, transform_indices = @transform_3, window_bounds = array<i64: 24, 24>}, {pipeline_mode = #tpu.pipeline_mode<synchronous>, transform_indices = @transform_4, window_bounds = array<i64: 1, 24>}, {pipeline_mode = #tpu.pipeline_mode<synchronous>, transform_indices = @transform_5, window_bounds = array<i64: 24, 2>}, {pipeline_mode = #tpu.pipeline_mode<synchronous>, transform_indices = @transform_6, window_bounds = array<i64: 1, 2>}, {transform_indices = @transform_7, window_bounds = array<i64: 64, 2>}]} {
    %c0 = arith.constant 0 : index
    %c0_0 = arith.constant 0 : index
    %0 = vector.load %arg1[%c0, %c0_0] : memref<64x4xf32, #tpu.memory_space<vmem>>, vector<64x4xf32>
    %c0_1 = arith.constant 0 : index
    %c0_2 = arith.constant 0 : index
    %1 = vector.load %arg2[%c0_1, %c0_2] : memref<4x24xf32, #tpu.memory_space<vmem>>, vector<4x24xf32>
    %cst = arith.constant dense<0.000000e+00> : vector<64x24xf32>
    %2 = tpu.matmul %0, %1, %cst {dimension_numbers = #tpu.dot_dimension_numbers<[1], [0], [0], [1], [0, 0, 1, 1], [], []>} : vector<64x4xf32>, vector<4x24xf32>, vector<64x24xf32> -> vector<64x24xf32>
    %c0_3 = arith.constant 0 : index
    %c0_4 = arith.constant 0 : index
    %3 = vector.load %arg3[%c0_3, %c0_4] : memref<1x24xf32, #tpu.memory_space<vmem>>, vector<1x24xf32>
    %4 = vector.broadcast %3 : vector<1x24xf32> to vector<64x24xf32>
    %5 = arith.addf %2, %4 : vector<64x24xf32>
    %cst_5 = arith.constant 0.000000e+00 : f32
    %6 = vector.broadcast %cst_5 : f32 to vector<64x24xf32>
    %7 = arith.maximumf %5, %6 : vector<64x24xf32>
    %c0_6 = arith.constant 0 : index
    %c0_7 = arith.constant 0 : index
    %8 = vector.load %arg4[%c0_6, %c0_7] : memref<24x24xf32, #tpu.memory_space<vmem>>, vector<24x24xf32>
    %cst_8 = arith.constant dense<0.000000e+00> : vector<64x24xf32>
    %9 = tpu.matmul %7, %8, %cst_8 {dimension_numbers = #tpu.dot_dimension_numbers<[1], [0], [0], [1], [0, 0, 1, 1], [], []>} : vector<64x24xf32>, vector<24x24xf32>, vector<64x24xf32> -> vector<64x24xf32>
    %c0_9 = arith.constant 0 : index
    %c0_10 = arith.constant 0 : index
    %10 = vector.load %arg5[%c0_9, %c0_10] : memref<1x24xf32, #tpu.memory_space<vmem>>, vector<1x24xf32>
    %11 = vector.broadcast %10 : vector<1x24xf32> to vector<64x24xf32>
    %12 = arith.addf %9, %11 : vector<64x24xf32>
    %cst_11 = arith.constant 0.000000e+00 : f32
    %13 = vector.broadcast %cst_11 : f32 to vector<64x24xf32>
    %14 = arith.maximumf %12, %13 : vector<64x24xf32>
    %c0_12 = arith.constant 0 : index
    %c0_13 = arith.constant 0 : index
    %15 = vector.load %arg6[%c0_12, %c0_13] : memref<24x2xf32, #tpu.memory_space<vmem>>, vector<24x2xf32>
    %cst_14 = arith.constant dense<0.000000e+00> : vector<64x2xf32>
    %16 = tpu.matmul %14, %15, %cst_14 {dimension_numbers = #tpu.dot_dimension_numbers<[1], [0], [0], [1], [0, 0, 1, 1], [], []>} : vector<64x24xf32>, vector<24x2xf32>, vector<64x2xf32> -> vector<64x2xf32>
    %c0_15 = arith.constant 0 : index
    %c0_16 = arith.constant 0 : index
    %17 = vector.load %arg7[%c0_15, %c0_16] : memref<1x2xf32, #tpu.memory_space<vmem>>, vector<1x2xf32>
    %18 = vector.broadcast %17 : vector<1x2xf32> to vector<64x2xf32>
    %19 = arith.addf %16, %18 : vector<64x2xf32>
    %c0_17 = arith.constant 0 : index
    %c0_18 = arith.constant 0 : index
    %20 = vector.load %arg8[%c0_17, %c0_18] : memref<64x2xf32, #tpu.memory_space<vmem>>, vector<64x2xf32>
    tpu.vector_store %arg8[%c0_17, %c0_18], %19 {strides = array<i32>} : memref<64x2xf32, #tpu.memory_space<vmem>>, vector<64x2xf32>,
    return
  }
  func.func @transform_0(%arg0: i32) -> (i32, i32) {
    %c0_i32 = arith.constant 0 : i32
    %c0_i32_0 = arith.constant 0 : i32
    return %arg0, %c0_i32 : i32, i32
  }
  func.func @transform_1(%arg0: i32) -> (i32, i32) {
    %c0_i32 = arith.constant 0 : i32
    %c0_i32_0 = arith.constant 0 : i32
    %c0_i32_1 = arith.constant 0 : i32
    return %c0_i32, %c0_i32_0 : i32, i32
  }
  func.func @transform_2(%arg0: i32) -> (i32, i32) {
    %c0_i32 = arith.constant 0 : i32
    %c0_i32_0 = arith.constant 0 : i32
    %c0_i32_1 = arith.constant 0 : i32
    return %c0_i32, %c0_i32_0 : i32, i32
  }
  func.func @transform_3(%arg0: i32) -> (i32, i32) {
    %c0_i32 = arith.constant 0 : i32
    %c0_i32_0 = arith.constant 0 : i32
    %c0_i32_1 = arith.constant 0 : i32
    return %c0_i32, %c0_i32_0 : i32, i32
  }
  func.func @transform_4(%arg0: i32) -> (i32, i32) {
    %c0_i32 = arith.constant 0 : i32
    %c0_i32_0 = arith.constant 0 : i32
    %c0_i32_1 = arith.constant 0 : i32
    return %c0_i32, %c0_i32_0 : i32, i32
  }
  func.func @transform_5(%arg0: i32) -> (i32, i32) {
    %c0_i32 = arith.constant 0 : i32
    %c0_i32_0 = arith.constant 0 : i32
    %c0_i32_1 = arith.constant 0 : i32
    return %c0_i32, %c0_i32_0 : i32, i32
  }
  func.func @transform_6(%arg0: i32) -> (i32, i32) {
    %c0_i32 = arith.constant 0 : i32
    %c0_i32_0 = arith.constant 0 : i32
    %c0_i32_1 = arith.constant 0 : i32
    return %c0_i32, %c0_i32_0 : i32, i32
  }
  func.func @transform_7(%arg0: i32) -> (i32, i32) {
    %c0_i32 = arith.constant 0 : i32
    %c0_i32_0 = arith.constant 0 : i32
    return %arg0, %c0_i32 : i32, i32
  }
}

</mosaic_0001>

<llo_original>
// kernel: policy_forward.1
$region0: #{policy_forward.1}
  #allocation0 [shape = 'u32[]', space=smem, size = 0x4, offset = 0x4, fixed_abs, tag = 'smem constant byte address 0x4 - core index']
  #allocation1 [shape = 'u32[72,128]{1,0:T(1,128)}', space=vmem, size = 0x9000, scoped, tag = 'internal scratch']
  %s0 = inlined_call_operand.vmem [shape: f32[128,4], index: 0, kind: input, shape index: {}]
  %s1 = inlined_call_operand.vmem [shape: f32[4,24], index: 1, kind: input, shape index: {}]
  %s2 = inlined_call_operand.vmem [shape: f32[1,24], index: 2, kind: input, shape index: {}]
  %s3 = inlined_call_operand.vmem [shape: f32[24,24], index: 3, kind: input, shape index: {}]
  %s4 = inlined_call_operand.vmem [shape: f32[1,24], index: 4, kind: input, shape index: {}]
  %s5 = inlined_call_operand.vmem [shape: f32[24,2], index: 5, kind: input, shape index: {}]
  %s6 = inlined_call_operand.vmem [shape: f32[1,2], index: 6, kind: input, shape index: {}]
  %s7 = inlined_call_operand.vmem [shape: f32[128,2], index: 7, kind: output, shape index: {}]
  %s8 = sld [smem:[#allocation0]]
  $region61: #{policy_forward.1} parent=0
    _
  %s10 = ssub.s32 1, %s8
  %s11 = scalar_select 0, %s10, %s8
  loop: start=0, step=1, limit=4
  $region2: #{policy_forward.1} parent=0 // loop_pre_header
    _
  $region3: #{policy_forward.1} parent=0 // loop_header
    %s13 = sphi 0, %s17
    %p14 = scmp.ge.s32.totalorder %s13, 4
    %s23 = sphi 0, %s25
    %s26 = sphi 0, %s23
    %s27 = sphi 0, %s26
    %s43 = sphi 0, %s27
    %s47 = sphi 0, %s47
    %s49 = sphi 0, %s47
    %s50 = sphi 0, %s49
    %s64 = sphi 0, %s50
    %s68 = sphi 0, %s68
    %s70 = sphi 0, %s68
    %s71 = sphi 0, %s70
    %s85 = sphi 0, %s71
    %s89 = sphi 0, %s89
    %s91 = sphi 0, %s89
    %s92 = sphi 0, %s91
    %s106 = sphi 0, %s92
    %s110 = sphi 0, %s110
    %s112 = sphi 0, %s110
    %s113 = sphi 0, %s112
    %s127 = sphi 0, %s113
    %s131 = sphi 0, %s131
    %s133 = sphi 0, %s131
    %s134 = sphi 0, %s133
    %s148 = sphi 0, %s134
    %s152 = sphi 0, %s152
    %s154 = sphi 0, %s152
    %s155 = sphi 0, %s154
    %s169 = sphi 0, %s155
    %s175 = sphi 0, %s177
    %s178 = sphi 0, %s175
    %s179 = sphi 0, %s178
    %s195 = sphi 0, %s179
  $region4: #{policy_forward.1} parent=0 // loop_header_branch
    %16 = sbr.rel (%p14) target = $region8
  $region5: #{policy_forward.1} parent=0 // loop_body
    %s18 = ssub.s32 %s13, 1
    %s19 = ssub.s32 %s13, 2
    %s20 = sadd.s32 %s13, 1
    %s21 = ssub.s32 %s13, %s20
    %p22 = scmp.eq.s32.totalorder %s21, 0
    %s24 = sadd.s32 %s23, 1
    %s25 = scalar_select %p22, %s23, %s24
    %p28 = pneg %p22
    %p29 = scmp.eq.s32.totalorder %s13, 1
    %p30 = por %p28, %p29
    %p31 = scmp.ne.s32.totalorder %s23, %s26
    %p32 = scmp.eq.s32.totalorder %s13, 0
    %p33 = por %p31, %p32
    %p34 = scmp.ne.s32.totalorder %s23, %s26
    %p35 = scmp.eq.s32.totalorder %s18, 1
    %p36 = por %p34, %p35
    %p37 = scmp.ne.s32.totalorder %s26, %s27
    %p38 = scmp.eq.s32.totalorder %s18, 0
    %p39 = por %p37, %p38
    %p40 = scmp.ne.s32.totalorder %s26, %s27
    %p41 = scmp.eq.s32.totalorder %s19, 1
    %p42 = por %p40, %p41
    %p44 = scmp.ne.s32.totalorder %s27, %s43
    %p45 = scmp.eq.s32.totalorder %s19, 0
    %p46 = por %p44, %p45
    %s48 = sadd.s32 %s47, 1
    %p51 = scmp.eq.s32.totalorder %s13, 1
    %p52 = scmp.ne.s32.totalorder %s47, %s49
    %p53 = scmp.eq.s32.totalorder %s13, 0
    %p54 = por %p52, %p53
    %p55 = scmp.ne.s32.totalorder %s47, %s49
    %p56 = scmp.eq.s32.totalorder %s18, 1
    %p57 = por %p55, %p56
    %p58 = scmp.ne.s32.totalorder %s49, %s50
    %p59 = scmp.eq.s32.totalorder %s18, 0
    %p60 = por %p58, %p59
    %p61 = scmp.ne.s32.totalorder %s49, %s50
    %p62 = scmp.eq.s32.totalorder %s19, 1
    %p63 = por %p61, %p62
    %p65 = scmp.ne.s32.totalorder %s50, %s64
    %p66 = scmp.eq.s32.totalorder %s19, 0
    %p67 = por %p65, %p66
    %s69 = sadd.s32 %s68, 1
    %p72 = scmp.eq.s32.totalorder %s13, 1
    %p73 = scmp.ne.s32.totalorder %s68, %s70
    %p74 = scmp.eq.s32.totalorder %s13, 0
    %p75 = por %p73, %p74
    %p76 = scmp.ne.s32.totalorder %s68, %s70
    %p77 = scmp.eq.s32.totalorder %s18, 1
    %p78 = por %p76, %p77
    %p79 = scmp.ne.s32.totalorder %s70, %s71
    %p80 = scmp.eq.s32.totalorder %s18, 0
    %p81 = por %p79, %p80
    %p82 = scmp.ne.s32.totalorder %s70, %s71
    %p83 = scmp.eq.s32.totalorder %s19, 1
    %p84 = por %p82, %p83
    %p86 = scmp.ne.s32.totalorder %s71, %s85
    %p87 = scmp.eq.s32.totalorder %s19, 0
    %p88 = por %p86, %p87
    %s90 = sadd.s32 %s89, 1
    %p93 = scmp.eq.s32.totalorder %s13, 1
    %p94 = scmp.ne.s32.totalorder %s89, %s91
    %p95 = scmp.eq.s32.totalorder %s13, 0
    %p96 = por %p94, %p95
    %p97 = scmp.ne.s32.totalorder %s89, %s91
    %p98 = scmp.eq.s32.totalorder %s18, 1
    %p99 = por %p97, %p98
    %p100 = scmp.ne.s32.totalorder %s91, %s92
    %p101 = scmp.eq.s32.totalorder %s18, 0
    %p102 = por %p100, %p101
    %p103 = scmp.ne.s32.totalorder %s91, %s92
    %p104 = scmp.eq.s32.totalorder %s19, 1
    %p105 = por %p103, %p104
    %p107 = scmp.ne.s32.totalorder %s92, %s106
    %p108 = scmp.eq.s32.totalorder %s19, 0
    %p109 = por %p107, %p108
    %s111 = sadd.s32 %s110, 1
    %p114 = scmp.eq.s32.totalorder %s13, 1
    %p115 = scmp.ne.s32.totalorder %s110, %s112
    %p116 = scmp.eq.s32.totalorder %s13, 0
    %p117 = por %p115, %p116
    %p118 = scmp.ne.s32.totalorder %s110, %s112
    %p119 = scmp.eq.s32.totalorder %s18, 1
    %p120 = por %p118, %p119
    %p121 = scmp.ne.s32.totalorder %s112, %s113
    %p122 = scmp.eq.s32.totalorder %s18, 0
    %p123 = por %p121, %p122
    %p124 = scmp.ne.s32.totalorder %s112, %s113
    %p125 = scmp.eq.s32.totalorder %s19, 1
    %p126 = por %p124, %p125
    %p128 = scmp.ne.s32.totalorder %s113, %s127
    %p129 = scmp.eq.s32.totalorder %s19, 0
    %p130 = por %p128, %p129
    %s132 = sadd.s32 %s131, 1
    %p135 = scmp.eq.s32.totalorder %s13, 1
    %p136 = scmp.ne.s32.totalorder %s131, %s133
    %p137 = scmp.eq.s32.totalorder %s13, 0
    %p138 = por %p136, %p137
    %p139 = scmp.ne.s32.totalorder %s131, %s133
    %p140 = scmp.eq.s32.totalorder %s18, 1
    %p141 = por %p139, %p140
    %p142 = scmp.ne.s32.totalorder %s133, %s134
    %p143 = scmp.eq.s32.totalorder %s18, 0
    %p144 = por %p142, %p143
    %p145 = scmp.ne.s32.totalorder %s133, %s134
    %p146 = scmp.eq.s32.totalorder %s19, 1
    %p147 = por %p145, %p146
    %p149 = scmp.ne.s32.totalorder %s134, %s148
    %p150 = scmp.eq.s32.totalorder %s19, 0
    %p151 = por %p149, %p150
    %s153 = sadd.s32 %s152, 1
    %p156 = scmp.eq.s32.totalorder %s13, 1
    %p157 = scmp.ne.s32.totalorder %s152, %s154
    %p158 = scmp.eq.s32.totalorder %s13, 0
    %p159 = por %p157, %p158
    %p160 = scmp.ne.s32.totalorder %s152, %s154
    %p161 = scmp.eq.s32.totalorder %s18, 1
    %p162 = por %p160, %p161
    %p163 = scmp.ne.s32.totalorder %s154, %s155
    %p164 = scmp.eq.s32.totalorder %s18, 0
    %p165 = por %p163, %p164
    %p166 = scmp.ne.s32.totalorder %s154, %s155
    %p167 = scmp.eq.s32.totalorder %s19, 1
    %p168 = por %p166, %p167
    %p170 = scmp.ne.s32.totalorder %s155, %s169
    %p171 = scmp.eq.s32.totalorder %s19, 0
    %p172 = por %p170, %p171
    %s173 = ssub.s32 %s13, %s20
    %p174 = scmp.eq.s32.totalorder %s173, 0
    %s176 = sadd.s32 %s175, 1
    %s177 = scalar_select %p174, %s175, %s176
    %p180 = pneg %p174
    %p181 = scmp.eq.s32.totalorder %s13, 1
    %p182 = por %p180, %p181
    %p183 = scmp.ne.s32.totalorder %s175, %s178
    %p184 = scmp.eq.s32.totalorder %s13, 0
    %p185 = por %p183, %p184
    %p186 = scmp.ne.s32.totalorder %s175, %s178
    %p187 = scmp.eq.s32.totalorder %s18, 1
    %p188 = por %p186, %p187
    %p189 = scmp.ne.s32.totalorder %s178, %s179
    %p190 = scmp.eq.s32.totalorder %s18, 0
    %p191 = por %p189, %p190
    %p192 = scmp.ne.s32.totalorder %s178, %s179
    %p193 = scmp.eq.s32.totalorder %s19, 1
    %p194 = por %p192, %p193
    %p196 = scmp.ne.s32.totalorder %s179, %s195
    %p197 = scmp.eq.s32.totalorder %s19, 0
    %p198 = por %p196, %p197
    %p199 = scmp.le.s32.totalorder 1, %s13
    %p200 = scmp.lt.s32.totalorder %s13, 3
    %p201 = pnand %p199, %p200
    %p202 = pneg %p201
    // Predicated region
    $region9: #{policy_forward.1} parent=5 // pred_check
      _
    $region10: #{policy_forward.1} parent=5 // pred_check_branch
      %204 = sbr.rel (%p201) target = $region12
    $region11: #{policy_forward.1} parent=5 // pred_region
      %s205 = ssub.s32 %s13, 1
      // Predicated region
      $region13: #{policy_forward.1} parent=11 // pred_check
        %p206 = pneg %p60
      $region14: #{policy_forward.1} parent=11 // pred_check_branch
        %208 = sbr.rel (%p206) target = $region16
      $region15: #{policy_forward.1} parent=11 // pred_region
        _
      $region16: #{policy_forward.1} parent=11 // pred_fallthru
        _
      // Predicated region
      $region17: #{policy_forward.1} parent=11 // pred_check
        %p209 = pneg %p81
      $region18: #{policy_forward.1} parent=11 // pred_check_branch
        %211 = sbr.rel (%p209) target = $region20
      $region19: #{policy_forward.1} parent=11 // pred_region
        _
      $region20: #{policy_forward.1} parent=11 // pred_fallthru
        _
      // Predicated region
      $region21: #{policy_forward.1} parent=11 // pred_check
        %p212 = pneg %p102
      $region22: #{policy_forward.1} parent=11 // pred_check_branch
        %214 = sbr.rel (%p212) target = $region24
      $region23: #{policy_forward.1} parent=11 // pred_region
        _
      $region24: #{policy_forward.1} parent=11 // pred_fallthru
        _
      // Predicated region
      $region25: #{policy_forward.1} parent=11 // pred_check
        %p215 = pneg %p123
      $region26: #{policy_forward.1} parent=11 // pred_check_branch
        %217 = sbr.rel (%p215) target = $region28
      $region27: #{policy_forward.1} parent=11 // pred_region
        _
      $region28: #{policy_forward.1} parent=11 // pred_fallthru
        _
      // Predicated region
      $region29: #{policy_forward.1} parent=11 // pred_check
        %p218 = pneg %p144
      $region30: #{policy_forward.1} parent=11 // pred_check_branch
        %220 = sbr.rel (%p218) target = $region32
      $region31: #{policy_forward.1} parent=11 // pred_region
        _
      $region32: #{policy_forward.1} parent=11 // pred_fallthru
        _
      // Predicated region
      $region33: #{policy_forward.1} parent=11 // pred_check
        %p221 = pneg %p165
      $region34: #{policy_forward.1} parent=11 // pred_check_branch
        %223 = sbr.rel (%p221) target = $region36
      $region35: #{policy_forward.1} parent=11 // pred_region
        _
      $region36: #{policy_forward.1} parent=11 // pred_fallthru
        _
    $region12: #{policy_forward.1} parent=5 // pred_fallthru
      _
    %p224 = scmp.lt.s32.totalorder %s13, 2
    // Predicated region
    $region37: #{policy_forward.1} parent=5 // pred_check
      %p225 = pneg %p224
    $region38: #{policy_forward.1} parent=5 // pred_check_branch
      %227 = sbr.rel (%p225) target = $region40
    $region39: #{policy_forward.1} parent=5 // pred_region
      // Predicated region
      $region41: #{policy_forward.1} parent=39 // pred_check
        %p228 = pneg %p33
      $region42: #{policy_forward.1} parent=39 // pred_check_branch
        %230 = sbr.rel (%p228) target = $region44
      $region43: #{policy_forward.1} parent=39 // pred_region
        %s231 = smul.u32 8, %s13
        %p232 = scmp.lt.s32.totalorder %s231, 15
        %s233 = scalar_select %p232, %s231, 15
        %s234 = smul.addr %s233, 8
        %s235 = scalar_lea.vmem %s0, %s234
        %s236 = smul.u32 8, %s13
      $region44: #{policy_forward.1} parent=39 // pred_fallthru
        _
    $region40: #{policy_forward.1} parent=5 // pred_fallthru
      _
    %p237 = scmp.le.s32.totalorder 1, %s13
    %p238 = scmp.lt.s32.totalorder %s13, 3
    %p239 = pnand %p237, %p238
    %p240 = pneg %p239
    // Predicated region
    $region45: #{policy_forward.1} parent=5 // pred_check
      _
    $region46: #{policy_forward.1} parent=5 // pred_check_branch
      %242 = sbr.rel (%p239) target = $region48
    $region47: #{policy_forward.1} parent=5 // pred_region
      %s243 = ssub.s32 %s13, 1
      %s244 = smul.u32 8, %s18
      %p245 = scmp.lt.s32.totalorder %s244, 15
      %s246 = scalar_select %p245, %s244, 15
      %s247 = smul.addr %s246, 8
      %s248 = scalar_lea.vmem %s0, %s247
      %p249 = pneg %p39
      %p250 = pneg %p36
      %p251 = pneg %p60
      %p252 = pneg %p57
      %p253 = pneg %p81
      %p254 = pneg %p78
      %p255 = pneg %p102
      %p256 = pneg %p99
      %p257 = pneg %p123
      %p258 = pneg %p120
      %p259 = pneg %p144
      %p260 = pneg %p141
      %p261 = pneg %p165
      %p262 = pneg %p162
      %p263 = pneg %p191
      %p264 = pneg %p188
      %s265 = smul.u32 8, %s18
      %p266 = scmp.lt.s32.totalorder %s265, 15
      %s267 = scalar_select %p266, %s265, 15
      %s268 = smul.addr %s267, 8
      %s269 = scalar_lea.vmem %s7, %s268
      %s270 = smul.u32 8, %s18
      %p271 = scmp.lt.s32.totalorder %s270, 15
      %s272 = scalar_select %p271, %s270, 15
      %s273 = smul.addr %s272, 8
      %s274 = scalar_lea.vmem %s0, %s273
      %s275 = smul.u32 8, %s18
      %s276 = smul.u32 8, %s18
      %p277 = scmp.lt.s32.totalorder %s276, 15
      %s278 = scalar_select %p277, %s276, 15
      %s279 = smul.addr %s278, 8
      %s280 = scalar_lea.vmem %s7, %s279
      %s281 = smul.u32 8, %s18
      %v282 = vld [vmem:[%s274] sm:$0xff]
      %v283 = vld [vmem:[%s274 + $0x8] sm:$0xff]
      %v284 = vld [vmem:[%s274 + $0x10] sm:$0xff]
      %v285 = vld [vmem:[%s274 + $0x18] sm:$0xff]
      %v286 = vld [vmem:[%s274 + $0x20] sm:$0xff]
      %v287 = vld [vmem:[%s274 + $0x28] sm:$0xff]
      %v288 = vld [vmem:[%s274 + $0x30] sm:$0xff]
      %v289 = vld [vmem:[%s274 + $0x38] sm:$0xff]
      %v290 = vld [vmem:[%s1] sm:$0xf]
      %v291 = vld [vmem:[%s2] sm:$0x1]
      %v293 = vperm.slane %v291, 0
      %vm295 = vcmask 31744
      %v297 = vsel %vm295, %v282, 0
      %v300 = vsel %vm295, %v283, 0
      %v303 = vsel %vm295, %v284, 0
      %v306 = vsel %vm295, %v285, 0
      %v309 = vsel %vm295, %v286, 0
      %v312 = vsel %vm295, %v287, 0
      %v315 = vsel %vm295, %v288, 0
      %v318 = vsel %vm295, %v289, 0
      %vm320 = vcmask 1043456
      %v322 = vsel %vm320, %v290, 0
      %324 = vmatpush.msra.mxu0 0.0
      %325 = vmatpush.msra.mxu0 0.0
      %326 = vmatpush.msra.mxu0 0.0
      %327 = vmatpush.msra.mxu0 0.0
      %328 = vmatpush.msra.mxu0 0.0
      %329 = vmatpush.msra.mxu0 0.0
      %330 = vmatpush.msra.mxu0 0.0
      %331 = vmatpush.msra.mxu0 0.0
      %332 = vmatpush.msra.mxu0 0.0
      %333 = vmatpush.msra.mxu0 0.0
      %334 = vmatpush.msra.mxu0 0.0
      %335 = vmatpush.msra.mxu0 0.0
      %336 = vmatpush.msra.mxu0 0.0
      %337 = vmatpush.msra.mxu0 0.0
      %338 = vmatpush.msra.mxu0 0.0
      %339 = vmatpush.msra.mxu0 %v322
      %340 = vmatmul.f32.gmra.mxu0 %v297
      %v341 = vpop.f32.mrf.mxu0
      %v342 = vadd.f32 %v293, %v341
      %343 = vmatmul.f32.gmra.mxu0 %v300
      %v344 = vpop.f32.mrf.mxu0
      %v345 = vadd.f32 %v293, %v344
      %346 = vmatmul.f32.gmra.mxu0 %v303
      %v347 = vpop.f32.mrf.mxu0
      %v348 = vadd.f32 %v293, %v347
      %349 = vmatmul.f32.gmra.mxu0 %v306
      %v350 = vpop.f32.mrf.mxu0
      %v351 = vadd.f32 %v293, %v350
      %352 = vmatmul.f32.gmra.mxu0 %v309
      %v353 = vpop.f32.mrf.mxu0
      %v354 = vadd.f32 %v293, %v353
      %355 = vmatmul.f32.gmra.mxu0 %v312
      %v356 = vpop.f32.mrf.mxu0
      %v357 = vadd.f32 %v293, %v356
      %358 = vmatmul.f32.gmra.mxu0 %v315
      %v359 = vpop.f32.mrf.mxu0
      %v360 = vadd.f32 %v293, %v359
      %361 = vmatmul.f32.gmra.mxu0 %v318
      %v362 = vpop.f32.mrf.mxu0
      %v363 = vadd.f32 %v293, %v362
      %364 = vdwg.mxu0
      %v365 = vmax.f32 %v342, 0.0
      %v366 = vmax.f32 %v345, 0.0
      %v367 = vmax.f32 %v348, 0.0
      %v368 = vmax.f32 %v351, 0.0
      %v369 = vmax.f32 %v354, 0.0
      %v370 = vmax.f32 %v357, 0.0
      %v371 = vmax.f32 %v360, 0.0
      %v372 = vmax.f32 %v363, 0.0
      %v373 = vld [vmem:[%s3] sm:$0xff]
      %v374 = vld [vmem:[%s3 + $0x8] sm:$0xff]
      %v375 = vld [vmem:[%s3 + $0x10] sm:$0xff]
      %v376 = vld [vmem:[%s4] sm:$0x1]
      %v378 = vperm.slane %v376, 0
      %vm380 = vcmask 195584
      %v382 = vsel %vm380, %v365, 0
      %v385 = vsel %vm380, %v366, 0
      %v388 = vsel %vm380, %v367, 0
      %v391 = vsel %vm380, %v368, 0
      %v394 = vsel %vm380, %v369, 0
      %v397 = vsel %vm380, %v370, 0
      %v400 = vsel %vm380, %v371, 0
      %v403 = vsel %vm380, %v372, 0
      %405 = vmatpush.msra.mxu0 0.0
      %406 = vmatpush.msra.mxu0 0.0
      %407 = vmatpush.msra.mxu0 0.0
      %408 = vmatpush.msra.mxu0 0.0
      %409 = vmatpush.msra.mxu0 0.0
      %410 = vmatpush.msra.mxu0 0.0
      %411 = vmatpush.msra.mxu0 0.0
      %412 = vmatpush.msra.mxu0 0.0
      %413 = vmatpush.msra.mxu0 0.0
      %414 = vmatpush.msra.mxu0 0.0
      %415 = vmatpush.msra.mxu0 0.0
      %416 = vmatpush.msra.mxu0 0.0
      %417 = vmatpush.msra.mxu0 0.0
      %418 = vmatpush.msra.mxu0 %v375
      %419 = vmatpush.msra.mxu0 %v374
      %420 = vmatpush.msra.mxu0 %v373
      %421 = vmatmul.f32.gmra.mxu0 %v382
      %v422 = vpop.f32.mrf.mxu0
      %v423 = vadd.f32 %v378, %v422
      %424 = vmatmul.f32.gmra.mxu0 %v385
      %v425 = vpop.f32.mrf.mxu0
      %v426 = vadd.f32 %v378, %v425
      %427 = vmatmul.f32.gmra.mxu0 %v388
      %v428 = vpop.f32.mrf.mxu0
      %v429 = vadd.f32 %v378, %v428
      %430 = vmatmul.f32.gmra.mxu0 %v391
      %v431 = vpop.f32.mrf.mxu0
      %v432 = vadd.f32 %v378, %v431
      %433 = vmatmul.f32.gmra.mxu0 %v394
      %v434 = vpop.f32.mrf.mxu0
      %v435 = vadd.f32 %v378, %v434
      %436 = vmatmul.f32.gmra.mxu0 %v397
      %v437 = vpop.f32.mrf.mxu0
      %v438 = vadd.f32 %v378, %v437
      %439 = vmatmul.f32.gmra.mxu0 %v400
      %v440 = vpop.f32.mrf.mxu0
      %v441 = vadd.f32 %v378, %v440
      %442 = vmatmul.f32.gmra.mxu0 %v403
      %v443 = vpop.f32.mrf.mxu0
      %v444 = vadd.f32 %v378, %v443
      %445 = vdwg.mxu0
      %v446 = vmax.f32 %v423, 0.0
      %v447 = vmax.f32 %v426, 0.0
      %v448 = vmax.f32 %v429, 0.0
      %v449 = vmax.f32 %v432, 0.0
      %v450 = vmax.f32 %v435, 0.0
      %v451 = vmax.f32 %v438, 0.0
      %v452 = vmax.f32 %v441, 0.0
      %v453 = vmax.f32 %v444, 0.0
      %v454 = vld [vmem:[%s5] sm:$0xff]
      %v455 = vld [vmem:[%s5 + $0x8] sm:$0xff]
      %v456 = vld [vmem:[%s5 + $0x10] sm:$0xff]
      %v457 = vld [vmem:[%s6] sm:$0x1]
      %v459 = vperm.slane %v457, 0
      %v462 = vsel %vm380, %v446, 0
      %v465 = vsel %vm380, %v447, 0
      %v468 = vsel %vm380, %v448, 0
      %v471 = vsel %vm380, %v449, 0
      %v474 = vsel %vm380, %v450, 0
      %v477 = vsel %vm380, %v451, 0
      %v480 = vsel %vm380, %v452, 0
      %v483 = vsel %vm380, %v453, 0
      %485 = vmatpush.msra.mxu0 0.0
      %486 = vmatpush.msra.mxu0 0.0
      %487 = vmatpush.msra.mxu0 0.0
      %488 = vmatpush.msra.mxu0 0.0
      %489 = vmatpush.msra.mxu0 0.0
      %490 = vmatpush.msra.mxu0 0.0
      %491 = vmatpush.msra.mxu0 0.0
      %492 = vmatpush.msra.mxu0 0.0
      %493 = vmatpush.msra.mxu0 0.0
      %494 = vmatpush.msra.mxu0 0.0
      %495 = vmatpush.msra.mxu0 0.0
      %496 = vmatpush.msra.mxu0 0.0
      %497 = vmatpush.msra.mxu0 0.0
      %498 = vmatpush.msra.mxu0 %v456
      %499 = vmatpush.msra.mxu0 %v455
      %500 = vmatpush.msra.mxu0 %v454
      %501 = vmatmul.f32.gmra.mxu0 %v462
      %v502 = vpop.f32.mrf.mxu0
      %v503 = vadd.f32 %v459, %v502
      %504 = vmatmul.f32.gmra.mxu0 %v465
      %v505 = vpop.f32.mrf.mxu0
      %v506 = vadd.f32 %v459, %v505
      %507 = vmatmul.f32.gmra.mxu0 %v468
      %v508 = vpop.f32.mrf.mxu0
      %v509 = vadd.f32 %v459, %v508
      %510 = vmatmul.f32.gmra.mxu0 %v471
      %v511 = vpop.f32.mrf.mxu0
      %v512 = vadd.f32 %v459, %v511
      %513 = vmatmul.f32.gmra.mxu0 %v474
      %v514 = vpop.f32.mrf.mxu0
      %v515 = vadd.f32 %v459, %v514
      %516 = vmatmul.f32.gmra.mxu0 %v477
      %v517 = vpop.f32.mrf.mxu0
      %v518 = vadd.f32 %v459, %v517
      %519 = vmatmul.f32.gmra.mxu0 %v480
      %v520 = vpop.f32.mrf.mxu0
      %v521 = vadd.f32 %v459, %v520
      %522 = vmatmul.f32.gmra.mxu0 %v483
      %v523 = vpop.f32.mrf.mxu0
      %v524 = vadd.f32 %v459, %v523
      %525 = vdwg.mxu0
      %vm526 = vcmask 15360
      %527 = vst.msk [vmem:[%s280] sm:$0xff] %vm526, %v503
      %528 = vst.msk [vmem:[%s280 + $0x8] sm:$0xff] %vm526, %v506
      %529 = vst.msk [vmem:[%s280 + $0x10] sm:$0xff] %vm526, %v509
      %530 = vst.msk [vmem:[%s280 + $0x18] sm:$0xff] %vm526, %v512
      %531 = vst.msk [vmem:[%s280 + $0x20] sm:$0xff] %vm526, %v515
      %532 = vst.msk [vmem:[%s280 + $0x28] sm:$0xff] %vm526, %v518
      %533 = vst.msk [vmem:[%s280 + $0x30] sm:$0xff] %vm526, %v521
      %534 = vst.msk [vmem:[%s280 + $0x38] sm:$0xff] %vm526, %v524
      %s535 = smul.u32 8, %s18
      %p536 = scmp.lt.s32.totalorder %s535, 15
      %s537 = scalar_select %p536, %s535, 15
      %s538 = smul.addr %s537, 8
      %s539 = scalar_lea.vmem %s7, %s538
      // Predicated region
      $region49: #{policy_forward.1} parent=47 // pred_check
        %p540 = pneg %p188
      $region50: #{policy_forward.1} parent=47 // pred_check_branch
        %542 = sbr.rel (%p540) target = $region52
      $region51: #{policy_forward.1} parent=47 // pred_region
        %s543 = smul.u32 8, %s18
      $region52: #{policy_forward.1} parent=47 // pred_fallthru
        _
    $region48: #{policy_forward.1} parent=5 // pred_fallthru
      _
    %p544 = scmp.le.s32.totalorder 2, %s13
    // Predicated region
    $region53: #{policy_forward.1} parent=5 // pred_check
      %p545 = pneg %p544
    $region54: #{policy_forward.1} parent=5 // pred_check_branch
      %547 = sbr.rel (%p545) target = $region56
    $region55: #{policy_forward.1} parent=5 // pred_region
      %s548 = ssub.s32 %s13, 2
      // Predicated region
      $region57: #{policy_forward.1} parent=55 // pred_check
        %p549 = pneg %p194
      $region58: #{policy_forward.1} parent=55 // pred_check_branch
        %551 = sbr.rel (%p549) target = $region60
      $region59: #{policy_forward.1} parent=55 // pred_region
        %s552 = smul.u32 8, %s19
        %p553 = scmp.lt.s32.totalorder %s552, 15
        %s554 = scalar_select %p553, %s552, 15
        %s555 = smul.addr %s554, 8
        %s556 = scalar_lea.vmem %s7, %s555
      $region60: #{policy_forward.1} parent=55 // pred_fallthru
        _
    $region56: #{policy_forward.1} parent=5 // pred_fallthru
      _
  $region6: #{policy_forward.1} parent=0 // loop_footer
    %s17 = sadd.s32 1, %s13
  $region7: #{policy_forward.1} parent=0 // loop_footer_branch
    %12 = sbr.rel target = $region3
  $region8: #{policy_forward.1} parent=0 // loop_exit
    _

</llo_original>
